<compile_context>
chip_gen: v6e
topology: v6e:2x2x1
jax: 0.10.0
libtpu: 0.0.40
codegen_flags: <defaults>
</compile_context>

<pallas_src>
import functools

import jax
import jax.numpy as jnp
from jax.experimental import pallas as pl
from jax.experimental.pallas import tpu as pltpu

LANE = 128     # f32 lane tile
SUBLANE = 8    # f32 sublane tile


def _round_up(n, m):
    return ((n + m - 1) // m) * m


def rnn_seq_kernel(x_ref, h0_ref, w_ref, b_ref, out_ref, hN_ref, comb_ref, *,
                   ip, hp):
    """One grid step = one recurrent RNN step.

    comb_ref (VMEM scratch, persists across the grid) holds [x_t | h_t]:
      lanes [0, ip)       : current input x_t     (refreshed every step)
      lanes [ip, ip+hp)   : hidden-state carry    (initialized from h0 at t=0)

    y      = comb @ W + b           (single fused MXU matmul)
    h_{t+1}= y[:, :hp]              (i2h, no activation)
    out_t  = log_softmax(y[:, hp:]) (i2o -> LogSoftmax; pad lanes carry -1e30
                                     baked into the bias)
    """
    t = pl.program_id(0)

    @pl.when(t == 0)
    def _init():
        comb_ref[:, ip:] = h0_ref[...]

    comb_ref[:, :ip] = x_ref[0]

    y = (jnp.dot(comb_ref[...], w_ref[...], preferred_element_type=jnp.float32)
         + b_ref[...])

    new_h = y[:, :hp]
    comb_ref[:, ip:] = new_h          # recurrent carry stays in VMEM
    hN_ref[...] = new_h               # constant block index -> written back once

    # LogSoftmax over axis=1; padded logit lanes are -1e30 (from the bias) and
    # vanish in the logsumexp.
    logits = y[:, hp:]
    m = jnp.max(logits, axis=1, keepdims=True)
    shifted = logits - m
    lse = jnp.log(jnp.sum(jnp.exp(shifted), axis=1, keepdims=True))
    out_ref[0] = shifted - lse


def prepare_params(w_i2h, b_i2h, w_i2o, b_i2o, input_size):
    """One-time preprocessing: transpose, undo the torch cat, fuse i2h/i2o into
    one weight matrix, zero-pad to lane-friendly shapes, and bake the
    log-softmax pad mask into the bias.

    torch layout: w_i2h:(H, I+H), b_i2h:(H,), w_i2o:(O, I+H), b_i2o:(O,)
    Returns ((W, b), dims) with W:(Ip+Hp, Hp+Op), b:(1, Hp+Op).
    """
    H, fan_in = w_i2h.shape
    O = w_i2o.shape[0]
    I = input_size
    assert fan_in == I + H

    Ip = _round_up(max(I, LANE), LANE)
    Hp = _round_up(max(H, LANE), LANE)
    Op = _round_up(max(O, LANE), LANE)

    wih_t = w_i2h.T.astype(jnp.float32)   # (I+H, H)
    wio_t = w_i2o.T.astype(jnp.float32)   # (I+H, O)

    w = jnp.zeros((Ip + Hp, Hp + Op), jnp.float32)
    w = w.at[:I, :H].set(wih_t[:I])                 # x rows -> hidden cols
    w = w.at[Ip:Ip + H, :H].set(wih_t[I:])          # h rows -> hidden cols
    w = w.at[:I, Hp:Hp + O].set(wio_t[:I])          # x rows -> output cols
    w = w.at[Ip:Ip + H, Hp:Hp + O].set(wio_t[I:])   # h rows -> output cols

    b = jnp.zeros((1, Hp + Op), jnp.float32)
    b = b.at[0, :H].set(b_i2h.astype(jnp.float32))
    b = b.at[0, Hp:Hp + O].set(b_i2o.astype(jnp.float32))
    # Mask padded LOGIT lanes only; hidden-half pad lanes (H:Hp) must stay 0
    # so the carried hidden state is not corrupted.
    b = b.at[0, Hp + O:].set(-1e30)

    dims = dict(I=I, H=H, O=O, Ip=Ip, Hp=Hp, Op=Op)
    return (w, b), dims


def make_rnn_forward(dims):
    """Builds a jitted whole-sequence forward closed over the static dims."""
    I, H, O = dims["I"], dims["H"], dims["O"]
    Ip, Hp, Op = dims["Ip"], dims["Hp"], dims["Op"]

    kernel = functools.partial(rnn_seq_kernel, ip=Ip, hp=Hp)

    @jax.jit
    def forward(x_seq, h0, w, b):
        T, B, _ = x_seq.shape
        Bp = _round_up(max(B, SUBLANE), SUBLANE)

        # Pad once per sequence (lane/sublane-dense slabs).
        x_pad = jnp.zeros((T, Bp, Ip), jnp.float32).at[:, :B, :I].set(x_seq)
        h_pad = jnp.zeros((Bp, Hp), jnp.float32).at[:B, :H].set(h0)

        cost = pl.CostEstimate(
            flops=2 * T * Bp * (Ip + Hp) * (Hp + Op),
            transcendentals=T * Bp * Op,
            bytes_accessed=4 * (x_pad.size + h_pad.size + w.size + b.size
                                + T * Bp * Op + Bp * Hp),
        )

        out_pad, hN_pad = pl.pallas_call(
            kernel,
            out_shape=(
                jax.ShapeDtypeStruct((T, Bp, Op), jnp.float32),   # log-probs per step
                jax.ShapeDtypeStruct((Bp, Hp), jnp.float32),      # final hidden
            ),
            grid_spec=pltpu.PrefetchScalarGridSpec(
                num_scalar_prefetch=0,
                grid=(T,),
                in_specs=[
                    pl.BlockSpec((1, Bp, Ip), lambda t: (t, 0, 0)),      # x_t streamed
                    pl.BlockSpec((Bp, Hp), lambda t: (0, 0)),            # h0: loaded once
                    pl.BlockSpec((Ip + Hp, Hp + Op), lambda t: (0, 0)),  # W: resident
                    pl.BlockSpec((1, Hp + Op), lambda t: (0, 0)),        # b: resident
                ],
                out_specs=(
                    pl.BlockSpec((1, Bp, Op), lambda t: (t, 0, 0)),      # per-step output
                    pl.BlockSpec((Bp, Hp), lambda t: (0, 0)),            # final hidden
                ),
                scratch_shapes=[
                    pltpu.VMEM((Bp, Ip + Hp), jnp.float32),              # [x | h] carry
                ],
            ),
            compiler_params=pltpu.CompilerParams(
                dimension_semantics=("arbitrary",)),   # recurrence: time is serial
            cost_estimate=cost,
        )(x_pad, h_pad, w, b)

        # Un-pad once per sequence.
        return out_pad[:, :B, :O], hN_pad[:B, :H]

    return forward


def init_params(key, input_size, hidden_size, output_size):
    """Deterministic init mimicking nn.Linear (uniform +-1/sqrt(fan_in))."""
    k1, k2, k3, k4 = jax.random.split(key, 4)
    fan_in = input_size + hidden_size
    bound = 1.0 / (fan_in ** 0.5)
    w_i2h = jax.random.uniform(k1, (hidden_size, fan_in), jnp.float32, -bound, bound)
    b_i2h = jax.random.uniform(k2, (hidden_size,), jnp.float32, -bound, bound)
    w_i2o = jax.random.uniform(k3, (output_size, fan_in), jnp.float32, -bound, bound)
    b_i2o = jax.random.uniform(k4, (output_size,), jnp.float32, -bound, bound)
    return w_i2h, b_i2h, w_i2o, b_i2o


if __name__ == "__main__":
    T, B = 8, 2
    input_size, hidden_size, output_size = 16, 32, 8

    key = jax.random.PRNGKey(0)
    kx, kp = jax.random.split(key, 2)

    x_seq = jax.random.normal(kx, (T, B, input_size), jnp.float32)
    h0 = jnp.zeros((B, hidden_size), jnp.float32)   # initHidden() per batch row
    w_i2h, b_i2h, w_i2o, b_i2o = init_params(kp, input_size, hidden_size, output_size)

    # One-time parameter preprocessing (transpose + fuse + pad + bias mask).
    (w, b), dims = prepare_params(w_i2h, b_i2h, w_i2o, b_i2o, input_size)
    rnn_forward = make_rnn_forward(dims)

    log_probs, final_hidden = rnn_forward(x_seq, h0, w, b)
    jax.block_until_ready((log_probs, final_hidden))

    # Pure-JAX reference: the original module's forward applied step by step.
    h = h0
    ref_outs = []
    for t in range(T):
        combined = jnp.concatenate([x_seq[t], h], axis=1)
        h = combined @ w_i2h.T + b_i2h
        logits = combined @ w_i2o.T + b_i2o
        ref_outs.append(
            logits - jax.scipy.special.logsumexp(logits, axis=1, keepdims=True))
    ref_out = jnp.stack(ref_outs, axis=0)

    assert log_probs.shape == (T, B, output_size)
    assert final_hidden.shape == (B, hidden_size)
    assert jnp.allclose(log_probs, ref_out, atol=1e-4), \
        float(jnp.max(jnp.abs(log_probs - ref_out)))
    assert jnp.allclose(final_hidden, h, atol=1e-4), \
        float(jnp.max(jnp.abs(final_hidden - h)))

    print("KERNEL_OK")
</pallas_src>

<mosaic_0001>
module attributes {stable_mosaic.version = 11 : i64} {
  func.func @rnn_seq_kernel(%arg0: i32, %arg1: memref<1x8x128xf32, #tpu.memory_space<vmem>>, %arg2: memref<8x128xf32, #tpu.memory_space<vmem>>, %arg3: memref<256x256xf32, #tpu.memory_space<vmem>>, %arg4: memref<1x256xf32, #tpu.memory_space<vmem>>, %arg5: memref<1x8x128xf32, #tpu.memory_space<vmem>>, %arg6: memref<8x128xf32, #tpu.memory_space<vmem>>, %arg7: memref<8x256xf32, #tpu.memory_space<vmem>>) attributes {dimension_semantics = [#tpu.dimension_semantics<arbitrary>], iteration_bounds = array<i64: 8>, scalar_prefetch = 0 : i64, scratch_operands = 1 : i64, tpu.core_type = #tpu.core_type<tc>, window_params = [{transform_indices = @transform_0, window_bounds = array<i64: 1, 8, 128>}, {pipeline_mode = #tpu.pipeline_mode<synchronous>, transform_indices = @transform_1, window_bounds = array<i64: 8, 128>}, {pipeline_mode = #tpu.pipeline_mode<synchronous>, transform_indices = @transform_2, window_bounds = array<i64: 256, 256>}, {pipeline_mode = #tpu.pipeline_mode<synchronous>, transform_indices = @transform_3, window_bounds = array<i64: 1, 256>}, {transform_indices = @transform_4, window_bounds = array<i64: 1, 8, 128>}, {pipeline_mode = #tpu.pipeline_mode<synchronous>, transform_indices = @transform_5, window_bounds = array<i64: 8, 128>}]} {
    %c0_i32 = arith.constant 0 : i32
    %0 = arith.cmpi eq, %arg0, %c0_i32 : i32
    %1 = arith.extui %0 : i1 to i32
    %c0_i32_0 = arith.constant 0 : i32
    %2 = arith.cmpi ne, %1, %c0_i32_0 : i32
    scf.if %2 {
      %c0_19 = arith.constant 0 : index
      %c0_20 = arith.constant 0 : index
      %29 = vector.load %arg2[%c0_19, %c0_20] : memref<8x128xf32, #tpu.memory_space<vmem>>, vector<8x128xf32>
      %c0_21 = arith.constant 0 : index
      %c128_22 = arith.constant 128 : index
      %30 = vector.load %arg7[%c0_21, %c128_22] : memref<8x256xf32, #tpu.memory_space<vmem>>, vector<8x128xf32>
      tpu.vector_store %arg7[%c0_21, %c128_22], %29 {strides = array<i32>} : memref<8x256xf32, #tpu.memory_space<vmem>>, vector<8x128xf32>,
    } else {
    }
    %c0 = arith.constant 0 : index
    %c0_1 = arith.constant 0 : index
    %c0_2 = arith.constant 0 : index
    %3 = vector.load %arg1[%c0, %c0_1, %c0_2] : memref<1x8x128xf32, #tpu.memory_space<vmem>>, vector<1x8x128xf32>
    %4 = vector.shape_cast %3 : vector<1x8x128xf32> to vector<8x128xf32>
    %c0_3 = arith.constant 0 : index
    %c0_4 = arith.constant 0 : index
    %5 = vector.load %arg7[%c0_3, %c0_4] : memref<8x256xf32, #tpu.memory_space<vmem>>, vector<8x128xf32>
    tpu.vector_store %arg7[%c0_3, %c0_4], %4 {strides = array<i32>} : memref<8x256xf32, #tpu.memory_space<vmem>>, vector<8x128xf32>,
    %c0_5 = arith.constant 0 : index
    %c0_6 = arith.constant 0 : index
    %6 = vector.load %arg7[%c0_5, %c0_6] : memref<8x256xf32, #tpu.memory_space<vmem>>, vector<8x256xf32>
    %c0_7 = arith.constant 0 : index
    %c0_8 = arith.constant 0 : index
    %7 = vector.load %arg3[%c0_7, %c0_8] : memref<256x256xf32, #tpu.memory_space<vmem>>, vector<256x256xf32>
    %cst = arith.constant dense<0.000000e+00> : vector<8x256xf32>
    %8 = tpu.matmul %6, %7, %cst {dimension_numbers = #tpu.dot_dimension_numbers<[1], [0], [0], [1], [0, 0, 1, 1], [], []>} : vector<8x256xf32>, vector<256x256xf32>, vector<8x256xf32> -> vector<8x256xf32>
    %c0_9 = arith.constant 0 : index
    %c0_10 = arith.constant 0 : index
    %9 = vector.load %arg4[%c0_9, %c0_10] : memref<1x256xf32, #tpu.memory_space<vmem>>, vector<1x256xf32>
    %10 = vector.broadcast %9 : vector<1x256xf32> to vector<8x256xf32>
    %11 = arith.addf %8, %10 : vector<8x256xf32>
    %12 = vector.extract_strided_slice %11 {offsets = [0, 0], sizes = [8, 128], strides = [1, 1]} : vector<8x256xf32> to vector<8x128xf32>
    %c0_11 = arith.constant 0 : index
    %c128 = arith.constant 128 : index
    %13 = vector.load %arg7[%c0_11, %c128] : memref<8x256xf32, #tpu.memory_space<vmem>>, vector<8x128xf32>
    tpu.vector_store %arg7[%c0_11, %c128], %12 {strides = array<i32>} : memref<8x256xf32, #tpu.memory_space<vmem>>, vector<8x128xf32>,
    %c0_12 = arith.constant 0 : index
    %c0_13 = arith.constant 0 : index
    %14 = vector.load %arg6[%c0_12, %c0_13] : memref<8x128xf32, #tpu.memory_space<vmem>>, vector<8x128xf32>
    tpu.vector_store %arg6[%c0_12, %c0_13], %12 {strides = array<i32>} : memref<8x128xf32, #tpu.memory_space<vmem>>, vector<8x128xf32>,
    %15 = vector.extract_strided_slice %11 {offsets = [0, 128], sizes = [8, 128], strides = [1, 1]} : vector<8x256xf32> to vector<8x128xf32>
    %cst_14 = arith.constant dense<0xFF800000> : vector<8xf32>
    %16 = vector.multi_reduction <maximumf>, %15, %cst_14 [1] : vector<8x128xf32> to vector<8xf32>
    %17 = vector.shape_cast %16 : vector<8xf32> to vector<8x1xf32>
    %18 = vector.broadcast %17 : vector<8x1xf32> to vector<8x128xf32>
    %19 = arith.subf %15, %18 : vector<8x128xf32>
    %20 = math.exp %19 : vector<8x128xf32>
    %cst_15 = arith.constant dense<0.000000e+00> : vector<8xf32>
    %21 = vector.multi_reduction <add>, %20, %cst_15 [1] : vector<8x128xf32> to vector<8xf32>
    %22 = vector.shape_cast %21 : vector<8xf32> to vector<8x1xf32>
    %23 = math.log %22 : vector<8x1xf32>
    %24 = vector.broadcast %23 : vector<8x1xf32> to vector<8x128xf32>
    %25 = arith.subf %19, %24 : vector<8x128xf32>
    %c0_16 = arith.constant 0 : index
    %c0_17 = arith.constant 0 : index
    %c0_18 = arith.constant 0 : index
    %26 = vector.load %arg5[%c0_16, %c0_17, %c0_18] : memref<1x8x128xf32, #tpu.memory_space<vmem>>, vector<1x8x128xf32>
    %27 = vector.shape_cast %26 : vector<1x8x128xf32> to vector<8x128xf32>
    %28 = vector.shape_cast %25 : vector<8x128xf32> to vector<1x8x128xf32>
    tpu.vector_store %arg5[%c0_16, %c0_17, %c0_18], %28 {strides = array<i32>} : memref<1x8x128xf32, #tpu.memory_space<vmem>>, vector<1x8x128xf32>,
    return
  }
  func.func @transform_0(%arg0: i32) -> (i32, i32, i32) {
    %c0_i32 = arith.constant 0 : i32
    %c0_i32_0 = arith.constant 0 : i32
    %c0_i32_1 = arith.constant 0 : i32
    return %arg0, %c0_i32, %c0_i32_0 : i32, i32, i32
  }
  func.func @transform_1(%arg0: i32) -> (i32, i32) {
    %c0_i32 = arith.constant 0 : i32
    %c0_i32_0 = arith.constant 0 : i32
    %c0_i32_1 = arith.constant 0 : i32
    return %c0_i32, %c0_i32_0 : i32, i32
  }
  func.func @transform_2(%arg0: i32) -> (i32, i32) {
    %c0_i32 = arith.constant 0 : i32
    %c0_i32_0 = arith.constant 0 : i32
    %c0_i32_1 = arith.constant 0 : i32
    return %c0_i32, %c0_i32_0 : i32, i32
  }
  func.func @transform_3(%arg0: i32) -> (i32, i32) {
    %c0_i32 = arith.constant 0 : i32
    %c0_i32_0 = arith.constant 0 : i32
    %c0_i32_1 = arith.constant 0 : i32
    return %c0_i32, %c0_i32_0 : i32, i32
  }
  func.func @transform_4(%arg0: i32) -> (i32, i32, i32) {
    %c0_i32 = arith.constant 0 : i32
    %c0_i32_0 = arith.constant 0 : i32
    %c0_i32_1 = arith.constant 0 : i32
    return %arg0, %c0_i32, %c0_i32_0 : i32, i32, i32
  }
  func.func @transform_5(%arg0: i32) -> (i32, i32) {
    %c0_i32 = arith.constant 0 : i32
    %c0_i32_0 = arith.constant 0 : i32
    %c0_i32_1 = arith.constant 0 : i32
    return %c0_i32, %c0_i32_0 : i32, i32
  }
}

</mosaic_0001>

<llo_original>
// kernel: forward.1
$region0: #{forward.1}
  #allocation0 [shape = 'u32[]', space=smem, size = 0x4, offset = 0x4, fixed_abs, tag = 'smem constant byte address 0x4 - core index']
  #allocation1 [shape = 'u32[144,128]{1,0:T(1,128)}', space=vmem, size = 0x12000, scoped, tag = 'internal scratch']
  #allocation2 [shape = 'f32[8,256]{1,0:T(8,128)}', space=vmem, size = 0x2000, scoped, tag = 'scratch operand']
  %s0 = inlined_call_operand.vmem [shape: f32[8,8,128], index: 0, kind: input, shape index: {}]
  %s1 = inlined_call_operand.vmem [shape: f32[8,128], index: 1, kind: input, shape index: {}]
  %s2 = inlined_call_operand.hbm [shape: f32[256,256], index: 2, kind: input, shape index: {}]
  %s3 = inlined_call_operand.vmem [shape: f32[1,256], index: 3, kind: input, shape index: {}]
  %s4 = inlined_call_operand.vmem [shape: f32[8,8,128], index: 4, kind: output, shape index: {0}]
  %s5 = inlined_call_operand.vmem [shape: f32[8,128], index: 5, kind: output, shape index: {1}]
  %6 = xla_tuple %s4, %s5
  %s7 = sld [smem:[#allocation0]]
  $region65: #{forward.1} parent=0
    _
  %s9 = ssub.s32 1, %s7
  %s10 = scalar_select 0, %s9, %s7
  $region1: #{forward.1} parent=0
    #allocation3 [shape = 'u8[262144]{0}', space=vmem, size = 0x40000, scoped, tag = 'input window, operand 2, single buffered']
    #allocation4 [shape = 's32[2]{0}', space=sflag, size = 0x8, scoped, tag = 'scoped memory for forward.1']
    %11 = vsyncpa [#allocation4], 0
    loop: start=0, step=1, limit=10
    $region2: #{forward.1} parent=1 // loop_pre_header
      _
    $region3: #{forward.1} parent=1 // loop_header
      %s13 = sphi 0, %s17
      %p14 = scmp.ge.s32.totalorder %s13, 10
      %s23 = sphi 0, %s25
      %s26 = sphi 0, %s23
      %s27 = sphi 0, %s26
      %s43 = sphi 0, %s27
      %s47 = sphi 0, %s47
      %s49 = sphi 0, %s47
      %s50 = sphi 0, %s49
      %s64 = sphi 0, %s50
      %s68 = sphi 0, %s68
      %s70 = sphi 0, %s68
      %s71 = sphi 0, %s70
      %s85 = sphi 0, %s71
      %s89 = sphi 0, %s89
      %s91 = sphi 0, %s89
      %s92 = sphi 0, %s91
      %s106 = sphi 0, %s92
      %s112 = sphi 0, %s114
      %s115 = sphi 0, %s112
      %s116 = sphi 0, %s115
      %s132 = sphi 0, %s116
      %s136 = sphi 0, %s136
      %s138 = sphi 0, %s136
      %s139 = sphi 0, %s138
      %s153 = sphi 0, %s139
    $region4: #{forward.1} parent=1 // loop_header_branch
      %16 = sbr.rel (%p14) target = $region8
    $region5: #{forward.1} parent=1 // loop_body
      %s18 = ssub.s32 %s13, 1
      %s19 = ssub.s32 %s13, 2
      %s20 = sadd.s32 %s13, 1
      %s21 = ssub.s32 %s13, %s20
      %p22 = scmp.eq.s32.totalorder %s21, 0
      %s24 = sadd.s32 %s23, 1
      %s25 = scalar_select %p22, %s23, %s24
      %p28 = pneg %p22
      %p29 = scmp.eq.s32.totalorder %s13, 7
      %p30 = por %p28, %p29
      %p31 = scmp.ne.s32.totalorder %s23, %s26
      %p32 = scmp.eq.s32.totalorder %s13, 0
      %p33 = por %p31, %p32
      %p34 = scmp.ne.s32.totalorder %s23, %s26
      %p35 = scmp.eq.s32.totalorder %s18, 7
      %p36 = por %p34, %p35
      %p37 = scmp.ne.s32.totalorder %s26, %s27
      %p38 = scmp.eq.s32.totalorder %s18, 0
      %p39 = por %p37, %p38
      %p40 = scmp.ne.s32.totalorder %s26, %s27
      %p41 = scmp.eq.s32.totalorder %s19, 7
      %p42 = por %p40, %p41
      %p44 = scmp.ne.s32.totalorder %s27, %s43
      %p45 = scmp.eq.s32.totalorder %s19, 0
      %p46 = por %p44, %p45
      %s48 = sadd.s32 %s47, 1
      %p51 = scmp.eq.s32.totalorder %s13, 7
      %p52 = scmp.ne.s32.totalorder %s47, %s49
      %p53 = scmp.eq.s32.totalorder %s13, 0
      %p54 = por %p52, %p53
      %p55 = scmp.ne.s32.totalorder %s47, %s49
      %p56 = scmp.eq.s32.totalorder %s18, 7
      %p57 = por %p55, %p56
      %p58 = scmp.ne.s32.totalorder %s49, %s50
      %p59 = scmp.eq.s32.totalorder %s18, 0
      %p60 = por %p58, %p59
      %p61 = scmp.ne.s32.totalorder %s49, %s50
      %p62 = scmp.eq.s32.totalorder %s19, 7
      %p63 = por %p61, %p62
      %p65 = scmp.ne.s32.totalorder %s50, %s64
      %p66 = scmp.eq.s32.totalorder %s19, 0
      %p67 = por %p65, %p66
      %s69 = sadd.s32 %s68, 1
      %p72 = scmp.eq.s32.totalorder %s13, 7
      %p73 = scmp.ne.s32.totalorder %s68, %s70
      %p74 = scmp.eq.s32.totalorder %s13, 0
      %p75 = por %p73, %p74
      %p76 = scmp.ne.s32.totalorder %s68, %s70
      %p77 = scmp.eq.s32.totalorder %s18, 7
      %p78 = por %p76, %p77
      %p79 = scmp.ne.s32.totalorder %s70, %s71
      %p80 = scmp.eq.s32.totalorder %s18, 0
      %p81 = por %p79, %p80
      %p82 = scmp.ne.s32.totalorder %s70, %s71
      %p83 = scmp.eq.s32.totalorder %s19, 7
      %p84 = por %p82, %p83
      %p86 = scmp.ne.s32.totalorder %s71, %s85
      %p87 = scmp.eq.s32.totalorder %s19, 0
      %p88 = por %p86, %p87
      %s90 = sadd.s32 %s89, 1
      %p93 = scmp.eq.s32.totalorder %s13, 7
      %p94 = scmp.ne.s32.totalorder %s89, %s91
      %p95 = scmp.eq.s32.totalorder %s13, 0
      %p96 = por %p94, %p95
      %p97 = scmp.ne.s32.totalorder %s89, %s91
      %p98 = scmp.eq.s32.totalorder %s18, 7
      %p99 = por %p97, %p98
      %p100 = scmp.ne.s32.totalorder %s91, %s92
      %p101 = scmp.eq.s32.totalorder %s18, 0
      %p102 = por %p100, %p101
      %p103 = scmp.ne.s32.totalorder %s91, %s92
      %p104 = scmp.eq.s32.totalorder %s19, 7
      %p105 = por %p103, %p104
      %p107 = scmp.ne.s32.totalorder %s92, %s106
      %p108 = scmp.eq.s32.totalorder %s19, 0
      %p109 = por %p107, %p108
      %s110 = ssub.s32 %s13, %s20
      %p111 = scmp.eq.s32.totalorder %s110, 0
      %s113 = sadd.s32 %s112, 1
      %s114 = scalar_select %p111, %s112, %s113
      %p117 = pneg %p111
      %p118 = scmp.eq.s32.totalorder %s13, 7
      %p119 = por %p117, %p118
      %p120 = scmp.ne.s32.totalorder %s112, %s115
      %p121 = scmp.eq.s32.totalorder %s13, 0
      %p122 = por %p120, %p121
      %p123 = scmp.ne.s32.totalorder %s112, %s115
      %p124 = scmp.eq.s32.totalorder %s18, 7
      %p125 = por %p123, %p124
      %p126 = scmp.ne.s32.totalorder %s115, %s116
      %p127 = scmp.eq.s32.totalorder %s18, 0
      %p128 = por %p126, %p127
      %p129 = scmp.ne.s32.totalorder %s115, %s116
      %p130 = scmp.eq.s32.totalorder %s19, 7
      %p131 = por %p129, %p130
      %p133 = scmp.ne.s32.totalorder %s116, %s132
      %p134 = scmp.eq.s32.totalorder %s19, 0
      %p135 = por %p133, %p134
      %s137 = sadd.s32 %s136, 1
      %p140 = scmp.eq.s32.totalorder %s13, 7
      %p141 = scmp.ne.s32.totalorder %s136, %s138
      %p142 = scmp.eq.s32.totalorder %s13, 0
      %p143 = por %p141, %p142
      %p144 = scmp.ne.s32.totalorder %s136, %s138
      %p145 = scmp.eq.s32.totalorder %s18, 7
      %p146 = por %p144, %p145
      %p147 = scmp.ne.s32.totalorder %s138, %s139
      %p148 = scmp.eq.s32.totalorder %s18, 0
      %p149 = por %p147, %p148
      %p150 = scmp.ne.s32.totalorder %s138, %s139
      %p151 = scmp.eq.s32.totalorder %s19, 7
      %p152 = por %p150, %p151
      %p154 = scmp.ne.s32.totalorder %s139, %s153
      %p155 = scmp.eq.s32.totalorder %s19, 0
      %p156 = por %p154, %p155
      %p157 = scmp.le.s32.totalorder 1, %s13
      %p158 = scmp.lt.s32.totalorder %s13, 9
      %p159 = pnand %p157, %p158
      %p160 = pneg %p159
      // Predicated region
      $region9: #{forward.1} parent=5 // pred_check
        _
      $region10: #{forward.1} parent=5 // pred_check_branch
        %162 = sbr.rel (%p159) target = $region12
      $region11: #{forward.1} parent=5 // pred_region
        %s163 = ssub.s32 %s13, 1
        // Predicated region
        $region13: #{forward.1} parent=11 // pred_check
          %p164 = pneg %p60
        $region14: #{forward.1} parent=11 // pred_check_branch
          %166 = sbr.rel (%p164) target = $region16
        $region15: #{forward.1} parent=11 // pred_region
          _
        $region16: #{forward.1} parent=11 // pred_fallthru
          _
        // Predicated region
        $region17: #{forward.1} parent=11 // pred_check
          %p167 = pneg %p81
        $region18: #{forward.1} parent=11 // pred_check_branch
          %169 = sbr.rel (%p167) target = $region20
        $region19: #{forward.1} parent=11 // pred_region
          %s171 = ssub.s32 8192, 8192
          %172 = vsyncadd [#allocation4], %s171
          %s173 = sshll.u32 [#allocation3], 4
          %s174 = int_to_ptr.vmem [resolvable:$true] %s173
          %179 = dma.hbm_to_vmem [thread:$0]  %s2, 8192, %s174, [#allocation4], 256, 256, 16
        $region20: #{forward.1} parent=11 // pred_fallthru
          _
        // Predicated region
        $region21: #{forward.1} parent=11 // pred_check
          %p180 = pneg %p102
        $region22: #{forward.1} parent=11 // pred_check_branch
          %182 = sbr.rel (%p180) target = $region24
        $region23: #{forward.1} parent=11 // pred_region
          _
        $region24: #{forward.1} parent=11 // pred_fallthru
          _
      $region12: #{forward.1} parent=5 // pred_fallthru
        _
      %p183 = scmp.lt.s32.totalorder %s13, 8
      // Predicated region
      $region25: #{forward.1} parent=5 // pred_check
        %p184 = pneg %p183
      $region26: #{forward.1} parent=5 // pred_check_branch
        %186 = sbr.rel (%p184) target = $region28
      $region27: #{forward.1} parent=5 // pred_region
        // Predicated region
        $region29: #{forward.1} parent=27 // pred_check
          %p187 = pneg %p33
        $region30: #{forward.1} parent=27 // pred_check_branch
          %189 = sbr.rel (%p187) target = $region32
        $region31: #{forward.1} parent=27 // pred_region
          %p190 = scmp.lt.s32.totalorder %s13, 7
          %s191 = scalar_select %p190, %s13, 7
          %s192 = smul.addr %s191, 8
          %s193 = scalar_lea.vmem %s0, %s192
        $region32: #{forward.1} parent=27 // pred_fallthru
          _
      $region28: #{forward.1} parent=5 // pred_fallthru
        _
      %p194 = scmp.le.s32.totalorder 1, %s13
      %p195 = scmp.lt.s32.totalorder %s13, 9
      %p196 = pnand %p194, %p195
      %p197 = pneg %p196
      // Predicated region
      $region33: #{forward.1} parent=5 // pred_check
        _
      $region34: #{forward.1} parent=5 // pred_check_branch
        %199 = sbr.rel (%p196) target = $region36
      $region35: #{forward.1} parent=5 // pred_region
        %s200 = ssub.s32 %s13, 1
        // Predicated region
        $region37: #{forward.1} parent=35 // pred_check
          %p201 = pneg %p81
        $region38: #{forward.1} parent=35 // pred_check_branch
          %203 = sbr.rel (%p201) target = $region40
        $region39: #{forward.1} parent=35 // pred_region
          %204 = dma.done [#allocation4], 8192
        $region40: #{forward.1} parent=35 // pred_fallthru
          _
        %p205 = scmp.lt.s32.totalorder %s18, 7
        %s206 = scalar_select %p205, %s18, 7
        %s207 = smul.addr %s206, 8
        %s208 = scalar_lea.vmem %s0, %s207
        %p209 = pneg %p39
        %p210 = pneg %p36
        %p211 = pneg %p60
        %p212 = pneg %p57
        %p213 = pneg %p81
        %p214 = pneg %p78
        %p215 = pneg %p102
        %p216 = pneg %p99
        %p217 = pneg %p128
        %p218 = pneg %p125
        %p219 = scmp.lt.s32.totalorder %s18, 7
        %s220 = scalar_select %p219, %s18, 7
        %s221 = smul.addr %s220, 8
        %s222 = scalar_lea.vmem %s4, %s221
        %p223 = pneg %p149
        %p224 = pneg %p146
        %p225 = scmp.lt.s32.totalorder %s18, 7
        %s226 = scalar_select %p225, %s18, 7
        %s227 = smul.addr %s226, 8
        %s228 = scalar_lea.vmem %s0, %s227
        %p229 = scmp.lt.s32.totalorder %s18, 7
        %s230 = scalar_select %p229, %s18, 7
        %s231 = smul.addr %s230, 8
        %s232 = scalar_lea.vmem %s4, %s231
        %p233 = scmp.eq.s32.totalorder %s18, 0
        // Predicated region
        $region41: #{forward.1} parent=35 // pred_check
          %p234 = pneg %p233
        $region42: #{forward.1} parent=35 // pred_check_branch
          %236 = sbr.rel (%p234) target = $region44
        $region43: #{forward.1} parent=35 // pred_region
          %v237 = vld [vmem:[%s1] sm:$0xff]
          %238 = vst [vmem:[#allocation2 + $0x8] sm:$0xff] %v237
        $region44: #{forward.1} parent=35 // pred_fallthru
          _
        %v239 = vld [vmem:[%s228] sm:$0xff]
        %240 = vst [vmem:[#allocation2] sm:$0xff] %v239
        %v241 = vld [vmem:[#allocation2] sm:$0xff]
        %v242 = vld [vmem:[#allocation2 + $0x8] sm:$0xff]
        %v243 = vld [vmem:[#allocation3] sm:$0xff]
        %v244 = vld [vmem:[#allocation3 + $0x8] sm:$0xff]
        %v245 = vld [vmem:[#allocation3 + $0x10] sm:$0xff]
        %v246 = vld [vmem:[#allocation3 + $0x18] sm:$0xff]
        %v247 = vld [vmem:[#allocation3 + $0x20] sm:$0xff]
        %v248 = vld [vmem:[#allocation3 + $0x28] sm:$0xff]
        %v249 = vld [vmem:[#allocation3 + $0x30] sm:$0xff]
        %v250 = vld [vmem:[#allocation3 + $0x38] sm:$0xff]
        %v251 = vld [vmem:[#allocation3 + $0x40] sm:$0xff]
        %v252 = vld [vmem:[#allocation3 + $0x48] sm:$0xff]
        %v253 = vld [vmem:[#allocation3 + $0x50] sm:$0xff]
        %v254 = vld [vmem:[#allocation3 + $0x58] sm:$0xff]
        %v255 = vld [vmem:[#allocation3 + $0x60] sm:$0xff]
        %v256 = vld [vmem:[#allocation3 + $0x68] sm:$0xff]
        %v257 = vld [vmem:[#allocation3 + $0x70] sm:$0xff]
        %v258 = vld [vmem:[#allocation3 + $0x78] sm:$0xff]
        %v259 = vld [vmem:[#allocation3 + $0x80] sm:$0xff]
        %v260 = vld [vmem:[#allocation3 + $0x88] sm:$0xff]
        %v261 = vld [vmem:[#allocation3 + $0x90] sm:$0xff]
        %v262 = vld [vmem:[#allocation3 + $0x98] sm:$0xff]
        %v263 = vld [vmem:[#allocation3 + $0xa0] sm:$0xff]
        %v264 = vld [vmem:[#allocation3 + $0xa8] sm:$0xff]
        %v265 = vld [vmem:[#allocation3 + $0xb0] sm:$0xff]
        %v266 = vld [vmem:[#allocation3 + $0xb8] sm:$0xff]
        %v267 = vld [vmem:[#allocation3 + $0xc0] sm:$0xff]
        %v268 = vld [vmem:[#allocation3 + $0xc8] sm:$0xff]
        %v269 = vld [vmem:[#allocation3 + $0xd0] sm:$0xff]
        %v270 = vld [vmem:[#allocation3 + $0xd8] sm:$0xff]
        %v271 = vld [vmem:[#allocation3 + $0xe0] sm:$0xff]
        %v272 = vld [vmem:[#allocation3 + $0xe8] sm:$0xff]
        %v273 = vld [vmem:[#allocation3 + $0xf0] sm:$0xff]
        %v274 = vld [vmem:[#allocation3 + $0xf8] sm:$0xff]
        %v275 = vld [vmem:[#allocation3 + $0x100] sm:$0xff]
        %v276 = vld [vmem:[#allocation3 + $0x108] sm:$0xff]
        %v277 = vld [vmem:[#allocation3 + $0x110] sm:$0xff]
        %v278 = vld [vmem:[#allocation3 + $0x118] sm:$0xff]
        %v279 = vld [vmem:[#allocation3 + $0x120] sm:$0xff]
        %v280 = vld [vmem:[#allocation3 + $0x128] sm:$0xff]
        %v281 = vld [vmem:[#allocation3 + $0x130] sm:$0xff]
        %v282 = vld [vmem:[#allocation3 + $0x138] sm:$0xff]
        %v283 = vld [vmem:[#allocation3 + $0x140] sm:$0xff]
        %v284 = vld [vmem:[#allocation3 + $0x148] sm:$0xff]
        %v285 = vld [vmem:[#allocation3 + $0x150] sm:$0xff]
        %v286 = vld [vmem:[#allocation3 + $0x158] sm:$0xff]
        %v287 = vld [vmem:[#allocation3 + $0x160] sm:$0xff]
        %v288 = vld [vmem:[#allocation3 + $0x168] sm:$0xff]
        %v289 = vld [vmem:[#allocation3 + $0x170] sm:$0xff]
        %v290 = vld [vmem:[#allocation3 + $0x178] sm:$0xff]
        %v291 = vld [vmem:[#allocation3 + $0x180] sm:$0xff]
        %v292 = vld [vmem:[#allocation3 + $0x188] sm:$0xff]
        %v293 = vld [vmem:[#allocation3 + $0x190] sm:$0xff]
        %v294 = vld [vmem:[#allocation3 + $0x198] sm:$0xff]
        %v295 = vld [vmem:[#allocation3 + $0x1a0] sm:$0xff]
        %v296 = vld [vmem:[#allocation3 + $0x1a8] sm:$0xff]
        %v297 = vld [vmem:[#allocation3 + $0x1b0] sm:$0xff]
        %v298 = vld [vmem:[#allocation3 + $0x1b8] sm:$0xff]
        %v299 = vld [vmem:[#allocation3 + $0x1c0] sm:$0xff]
        %v300 = vld [vmem:[#allocation3 + $0x1c8] sm:$0xff]
        %v301 = vld [vmem:[#allocation3 + $0x1d0] sm:$0xff]
        %v302 = vld [vmem:[#allocation3 + $0x1d8] sm:$0xff]
        %v303 = vld [vmem:[#allocation3 + $0x1e0] sm:$0xff]
        %v304 = vld [vmem:[#allocation3 + $0x1e8] sm:$0xff]
        %v305 = vld [vmem:[#allocation3 + $0x1f0] sm:$0xff]
        %v306 = vld [vmem:[#allocation3 + $0x1f8] sm:$0xff]
        %v307 = vld [vmem:[%s3] sm:$0x3]
        %v309 = vlaneseq
        %v310 = vshrl.u32 %v309, 7
        %v311 = vsub.s32 0, %v310
        %v312 = vrot.slane %v307, %v311
        %v313 = vlaneseq
        %v314 = vshrl.u32 %v313, 7
        %v315 = vsub.s32 1, %v314
        %v316 = vrot.slane %v307, %v315
        %319 = vmatprep.subr.mxu0 %v274
        %320 = vmatpush1.msra.mxu0 %v273
        %321 = vmatprep.subr.mxu0 %v272
        %322 = vmatpush1.msra.mxu0 %v271
        %323 = vmatprep.subr.mxu0 %v270
        %324 = vmatpush1.msra.mxu0 %v269
        %325 = vmatprep.subr.mxu0 %v268
        %326 = vmatpush1.msra.mxu0 %v267
        %327 = vmatprep.subr.mxu0 %v266
        %328 = vmatpush1.msra.mxu0 %v265
        %329 = vmatprep.subr.mxu0 %v264
        %330 = vmatpush1.msra.mxu0 %v263
        %331 = vmatprep.subr.mxu0 %v262
        %332 = vmatpush1.msra.mxu0 %v261
        %333 = vmatprep.subr.mxu0 %v260
        %334 = vmatpush1.msra.mxu0 %v259
        %335 = vmatprep.subr.mxu0 %v258
        %336 = vmatpush1.msra.mxu0 %v257
        %337 = vmatprep.subr.mxu0 %v256
        %338 = vmatpush1.msra.mxu0 %v255
        %339 = vmatprep.subr.mxu0 %v254
        %340 = vmatpush1.msra.mxu0 %v253
        %341 = vmatprep.subr.mxu0 %v252
        %342 = vmatpush1.msra.mxu0 %v251
        %343 = vmatprep.subr.mxu0 %v250
        %344 = vmatpush1.msra.mxu0 %v249
        %345 = vmatprep.subr.mxu0 %v248
        %346 = vmatpush1.msra.mxu0 %v247
        %347 = vmatprep.subr.mxu0 %v246
        %348 = vmatpush1.msra.mxu0 %v245
        %349 = vmatprep.subr.mxu0 %v244
        %350 = vmatpush1.msra.mxu0 %v243
        %351 = vmatprep.subr.mxu0 %v306
        %352 = vmatpush2.msra.mxu0 %v305
        %353 = vmatprep.subr.mxu0 %v304
        %354 = vmatpush2.msra.mxu0 %v303
        %355 = vmatprep.subr.mxu0 %v302
        %356 = vmatpush2.msra.mxu0 %v301
        %357 = vmatprep.subr.mxu0 %v300
        %358 = vmatpush2.msra.mxu0 %v299
        %359 = vmatprep.subr.mxu0 %v298
        %360 = vmatpush2.msra.mxu0 %v297
        %361 = vmatprep.subr.mxu0 %v296
        %362 = vmatpush2.msra.mxu0 %v295
        %363 = vmatprep.subr.mxu0 %v294
        %364 = vmatpush2.msra.mxu0 %v293
        %365 = vmatprep.subr.mxu0 %v292
        %366 = vmatpush2.msra.mxu0 %v291
        %367 = vmatprep.subr.mxu0 %v290
        %368 = vmatpush2.msra.mxu0 %v289
        %369 = vmatprep.subr.mxu0 %v288
        %370 = vmatpush2.msra.mxu0 %v287
        %371 = vmatprep.subr.mxu0 %v286
        %372 = vmatpush2.msra.mxu0 %v285
        %373 = vmatprep.subr.mxu0 %v284
        %374 = vmatpush2.msra.mxu0 %v283
        %375 = vmatprep.subr.mxu0 %v282
        %376 = vmatpush2.msra.mxu0 %v281
        %377 = vmatprep.subr.mxu0 %v280
        %378 = vmatpush2.msra.mxu0 %v279
        %379 = vmatprep.subr.mxu0 %v278
        %380 = vmatpush2.msra.mxu0 %v277
        %381 = vmatprep.subr.mxu0 %v276
        %382 = vmatpush2.msra.mxu0 %v275
        %383 = vmatprep.mubr.f32.mxu0 %v242
        %384 = vmatmul.mubr.f32.gmra.mxu0 %v241
        %v385 = vpop.f32.mrf.mxu0
        %v386 = vadd.f32 %v312, %v385
        %v387 = vpop.f32.mrf.mxu0
        %v388 = vadd.f32 %v316, %v387
        %389 = vdwg.mxu0
        %390 = vst [vmem:[#allocation2 + $0x8] sm:$0xff] %v386
        %391 = vst [vmem:[%s5] sm:$0xff] %v386
        %392 = vmax.xlane.f32.xlu0 %v388
        %v393 = vpop.xlane.xlu0 %392
        %v394 = vsub.f32 %v388, %v393
        %v395 = vmul.f32 %v394, 1.442695
        %v396 = vpow.pop %v395
        %397 = vadd.xlane.f32.xlu0 %v396
        %v398 = vpop.xlane.xlu0 %397
        %v399 = vlog2.pop %v398
        %v400 = vmul.f32 %v399, 0.6931472
        %v401 = vsub.f32 %v394, %v400
        %402 = vst [vmem:[%s232] sm:$0xff] %v401
        %p403 = scmp.lt.s32.totalorder %s18, 7
        %s404 = scalar_select %p403, %s18, 7
        %s405 = smul.addr %s404, 8
        %s406 = scalar_lea.vmem %s4, %s405
        // Predicated region
        $region45: #{forward.1} parent=35 // pred_check
          %p407 = pneg %p125
        $region46: #{forward.1} parent=35 // pred_check_branch
          %409 = sbr.rel (%p407) target = $region48
        $region47: #{forward.1} parent=35 // pred_region
          _
        $region48: #{forward.1} parent=35 // pred_fallthru
          _
        // Predicated region
        $region49: #{forward.1} parent=35 // pred_check
          %p410 = pneg %p146
        $region50: #{forward.1} parent=35 // pred_check_branch
          %412 = sbr.rel (%p410) target = $region52
        $region51: #{forward.1} parent=35 // pred_region
          _
        $region52: #{forward.1} parent=35 // pred_fallthru
          _
        // Predicated region
        $region53: #{forward.1} parent=35 // pred_check
          %p413 = pneg %p146
        $region54: #{forward.1} parent=35 // pred_check_branch
          %415 = sbr.rel (%p413) target = $region56
        $region55: #{forward.1} parent=35 // pred_region
          _
        $region56: #{forward.1} parent=35 // pred_fallthru
          _
      $region36: #{forward.1} parent=5 // pred_fallthru
        _
      %p416 = scmp.le.s32.totalorder 2, %s13
      // Predicated region
      $region57: #{forward.1} parent=5 // pred_check
        %p417 = pneg %p416
      $region58: #{forward.1} parent=5 // pred_check_branch
        %419 = sbr.rel (%p417) target = $region60
      $region59: #{forward.1} parent=5 // pred_region
        %s420 = ssub.s32 %s13, 2
        // Predicated region
        $region61: #{forward.1} parent=59 // pred_check
          %p421 = pneg %p131
        $region62: #{forward.1} parent=59 // pred_check_branch
          %423 = sbr.rel (%p421) target = $region64
        $region63: #{forward.1} parent=59 // pred_region
          %p424 = scmp.lt.s32.totalorder %s19, 7
          %s425 = scalar_select %p424, %s19, 7
          %s426 = smul.addr %s425, 8
          %s427 = scalar_lea.vmem %s4, %s426
        $region64: #{forward.1} parent=59 // pred_fallthru
          _
      $region60: #{forward.1} parent=5 // pred_fallthru
        _
    $region6: #{forward.1} parent=1 // loop_footer
      %s17 = sadd.s32 1, %s13
    $region7: #{forward.1} parent=1 // loop_footer_branch
      %12 = sbr.rel target = $region3
    $region8: #{forward.1} parent=1 // loop_exit
      _
    %428 = vsyncpa [#allocation4], 1
    %s429 = scalar_lea.sflag [#allocation4], 1
    %430 = vsyncpa %s429, 1

</llo_original>
